<compile_context>
chip_gen: v5e
topology: v5e:2x2
jax: 0.10.0
libtpu: 0.0.40
codegen_flags: <defaults>
</compile_context>

<pallas_src>
import functools
import math

import jax
import jax.numpy as jnp
from jax import lax
from jax.experimental import pallas as pl
from jax.experimental.pallas import tpu as pltpu

_SQRT_2_INV = 1.0 / math.sqrt(2.0)


def _bert_intermediate_kernel(x_ref, w_ref, b_ref, o_ref, acc_ref, *, precision):
    # x_ref: (tm, tk)   w_ref: (tn, tk)  [PyTorch layout]   b_ref: (1, tn)
    # o_ref: (tm, tn)   acc_ref: (tm, tn) f32 scratch, persistent across k
    k = pl.program_id(2)

    @pl.when(k == 0)
    def _():
        acc_ref[...] = jnp.zeros_like(acc_ref)

    # Contract the K axes of x (axis 1) and W (axis 1) directly on the MXU;
    # no transposed weight copy is ever materialized in HBM.
    acc_ref[...] += lax.dot_general(
        x_ref[...],
        w_ref[...],
        dimension_numbers=(((1,), (1,)), ((), ())),
        preferred_element_type=jnp.float32,
        precision=precision,
    )

    @pl.when(k == pl.num_programs(2) - 1)
    def _():
        # Bias + exact-erf GELU applied once per output tile, in f32 (EUP erf).
        acc = acc_ref[...] + b_ref[...].astype(jnp.float32)
        gelu = acc * 0.5 * (1.0 + lax.erf(acc * jnp.float32(_SQRT_2_INV)))
        o_ref[...] = gelu.astype(o_ref.dtype)


def _pick_feature_tile(dim, candidates=(512, 256, 128)):
    """Largest aligned tile that evenly divides `dim`; else a single full block."""
    for c in candidates:
        if dim % c == 0:
            return c
    # Unaligned feature dim: block == full array dim is always legal.
    return dim


def bert_intermediate(hidden_states, weight, bias, *, precision=None):
    """hidden_states: (B, S, K); weight: (N, K) [PyTorch nn.Linear layout]; bias: (N,)."""
    B, S, K = hidden_states.shape
    N = weight.shape[0]
    assert weight.shape == (N, K), weight.shape
    assert bias.shape == (N,), bias.shape

    M = B * S
    x2d = hidden_states.reshape(M, K)

    # --- M (rows): pad so row tiles are 8-aligned; 256-row tiles for large M. ---
    tm_target = 256
    if M >= tm_target:
        m_pad = -M % tm_target
        tm = tm_target
    else:
        m_pad = -M % 8
        tm = M + m_pad
    if m_pad:
        x2d = jnp.pad(x2d, ((0, m_pad), (0, 0)))
    Mp = M + m_pad

    # --- N / K: 512-ish tiles (MXU-friendly on v6e/v7x, fine on v5e). ---
    tn = _pick_feature_tile(N)
    tk = _pick_feature_tile(K)

    b2d = bias.reshape(1, N)
    grid = (Mp // tm, N // tn, K // tk)

    dsize = jnp.dtype(hidden_states.dtype).itemsize
    cost = pl.CostEstimate(
        flops=2 * M * K * N,
        transcendentals=M * N,
        bytes_accessed=(M * K + N * K + N + M * N) * dsize,
    )

    kernel = functools.partial(_bert_intermediate_kernel, precision=precision)

    out = pl.pallas_call(
        kernel,
        out_shape=jax.ShapeDtypeStruct((Mp, N), hidden_states.dtype),
        grid_spec=pltpu.PrefetchScalarGridSpec(
            num_scalar_prefetch=0,
            grid=grid,
            in_specs=[
                pl.BlockSpec((tm, tk), lambda m, n, k: (m, k)),   # activations
                pl.BlockSpec((tn, tk), lambda m, n, k: (n, k)),   # weight (N, K)
                pl.BlockSpec((1, tn), lambda m, n, k: (0, n)),    # bias
            ],
            out_specs=pl.BlockSpec((tm, tn), lambda m, n, k: (m, n)),
            scratch_shapes=[pltpu.VMEM((tm, tn), jnp.float32)],
        ),
        compiler_params=pltpu.CompilerParams(
            dimension_semantics=("parallel", "parallel", "arbitrary"),
        ),
        cost_estimate=cost,
    )(x2d, weight, b2d)

    if m_pad:
        out = out[:M]
    return out.reshape(B, S, N)


if __name__ == "__main__":
    key = jax.random.PRNGKey(0)

    def make_case(k, batch, seq, hidden, intermediate, dtype=jnp.float32):
        kx, kw, kb = jax.random.split(k, 3)
        x = jax.random.normal(kx, (batch, seq, hidden), dtype=dtype)
        bound = 1.0 / math.sqrt(hidden)
        w = jax.random.uniform(kw, (intermediate, hidden),
                               minval=-bound, maxval=bound, dtype=dtype)
        b = jax.random.uniform(kb, (intermediate,),
                               minval=-bound, maxval=bound, dtype=dtype)
        return x, w, b

    def reference(x, w, b):
        y = jnp.einsum("bsk,nk->bsn", x, w,
                       precision=lax.Precision.HIGHEST) + b
        return y * 0.5 * (1.0 + lax.erf(y / jnp.sqrt(jnp.float32(2.0))))

    fwd = jax.jit(functools.partial(bert_intermediate,
                                    precision=lax.Precision.HIGHEST))

    k1, k2 = jax.random.split(key)

    # Small shapes consistent with the module (hidden=32, intermediate=128).
    x, w, b = make_case(k1, batch=2, seq=8, hidden=32, intermediate=128)
    out = jax.block_until_ready(fwd(x, w, b))
    ref = reference(x, w, b)
    assert out.shape == ref.shape
    assert jnp.allclose(out, ref, atol=1e-4, rtol=1e-4), "mismatch (small case)"

    # 128-aligned case that exercises the tiled (m, n, k) grid + accumulator.
    x, w, b = make_case(k2, batch=2, seq=256, hidden=1024, intermediate=1024)
    out = jax.block_until_ready(fwd(x, w, b))
    ref = reference(x, w, b)
    assert jnp.allclose(out, ref, atol=1e-4, rtol=1e-4), "mismatch (tiled case)"

    print("KERNEL_OK")
</pallas_src>

<mosaic_0001>
module attributes {stable_mosaic.version = 11 : i64} {
  func.func @_bert_intermediate_kernel(%arg0: i32, %arg1: i32, %arg2: i32, %arg3: memref<16x32xf32, #tpu.memory_space<vmem>>, %arg4: memref<128x32xf32, #tpu.memory_space<vmem>>, %arg5: memref<1x128xf32, #tpu.memory_space<vmem>>, %arg6: memref<16x128xf32, #tpu.memory_space<vmem>>, %arg7: memref<16x128xf32, #tpu.memory_space<vmem>>) attributes {dimension_semantics = [#tpu.dimension_semantics<parallel>, #tpu.dimension_semantics<parallel>, #tpu.dimension_semantics<arbitrary>], iteration_bounds = array<i64: 1, 1, 1>, scalar_prefetch = 0 : i64, scratch_operands = 1 : i64, tpu.core_type = #tpu.core_type<tc>, window_params = [{transform_indices = @transform_0, window_bounds = array<i64: 16, 32>}, {transform_indices = @transform_1, window_bounds = array<i64: 128, 32>}, {transform_indices = @transform_2, window_bounds = array<i64: 1, 128>}, {transform_indices = @transform_3, window_bounds = array<i64: 16, 128>}]} {
    %c0_i32 = arith.constant 0 : i32
    %0 = arith.cmpi eq, %arg2, %c0_i32 : i32
    %1 = arith.extui %0 : i1 to i32
    %c0_i32_0 = arith.constant 0 : i32
    %2 = arith.cmpi ne, %1, %c0_i32_0 : i32
    scf.if %2 {
      %cst_10 = arith.constant 0.000000e+00 : f32
      %12 = vector.broadcast %cst_10 : f32 to vector<16x128xf32>
      %c0_11 = arith.constant 0 : index
      %c0_12 = arith.constant 0 : index
      %13 = vector.load %arg7[%c0_11, %c0_12] : memref<16x128xf32, #tpu.memory_space<vmem>>, vector<16x128xf32>
      tpu.vector_store %arg7[%c0_11, %c0_12], %12 {strides = array<i32>} : memref<16x128xf32, #tpu.memory_space<vmem>>, vector<16x128xf32>,
    } else {
    }
    %c0 = arith.constant 0 : index
    %c0_1 = arith.constant 0 : index
    %3 = vector.load %arg7[%c0, %c0_1] : memref<16x128xf32, #tpu.memory_space<vmem>>, vector<16x128xf32>
    %c0_2 = arith.constant 0 : index
    %c0_3 = arith.constant 0 : index
    %4 = vector.load %arg3[%c0_2, %c0_3] : memref<16x32xf32, #tpu.memory_space<vmem>>, vector<16x32xf32>
    %c0_4 = arith.constant 0 : index
    %c0_5 = arith.constant 0 : index
    %5 = vector.load %arg4[%c0_4, %c0_5] : memref<128x32xf32, #tpu.memory_space<vmem>>, vector<128x32xf32>
    %cst = arith.constant dense<0.000000e+00> : vector<16x128xf32>
    %6 = tpu.matmul %4, %5, %cst {dimension_numbers = #tpu.dot_dimension_numbers<[1], [1], [0], [0], [0, 0, 1, 0], [], []>, precision = #tpu.contract_precision<fp32>} : vector<16x32xf32>, vector<128x32xf32>, vector<16x128xf32> -> vector<16x128xf32>
    %7 = arith.addf %3, %6 : vector<16x128xf32>
    %c0_6 = arith.constant 0 : index
    %c0_7 = arith.constant 0 : index
    %8 = vector.load %arg7[%c0_6, %c0_7] : memref<16x128xf32, #tpu.memory_space<vmem>>, vector<16x128xf32>
    tpu.vector_store %arg7[%c0_6, %c0_7], %7 {strides = array<i32>} : memref<16x128xf32, #tpu.memory_space<vmem>>, vector<16x128xf32>,
    %c0_i32_8 = arith.constant 0 : i32
    %9 = arith.cmpi eq, %arg2, %c0_i32_8 : i32
    %10 = arith.extui %9 : i1 to i32
    %c0_i32_9 = arith.constant 0 : i32
    %11 = arith.cmpi ne, %10, %c0_i32_9 : i32
    scf.if %11 {
      %c0_10 = arith.constant 0 : index
      %c0_11 = arith.constant 0 : index
      %12 = vector.load %arg7[%c0_10, %c0_11] : memref<16x128xf32, #tpu.memory_space<vmem>>, vector<16x128xf32>
      %c0_12 = arith.constant 0 : index
      %c0_13 = arith.constant 0 : index
      %13 = vector.load %arg5[%c0_12, %c0_13] : memref<1x128xf32, #tpu.memory_space<vmem>>, vector<1x128xf32>
      %14 = vector.broadcast %13 : vector<1x128xf32> to vector<16x128xf32>
      %15 = arith.addf %12, %14 : vector<16x128xf32>
      %cst_14 = arith.constant 5.000000e-01 : f32
      %16 = vector.broadcast %cst_14 : f32 to vector<16x128xf32>
      %17 = arith.mulf %15, %16 : vector<16x128xf32>
      %cst_15 = arith.constant 0.707106769 : f32
      %18 = vector.broadcast %cst_15 : f32 to vector<16x128xf32>
      %19 = arith.mulf %15, %18 : vector<16x128xf32>
      %20 = math.erf %19 : vector<16x128xf32>
      %cst_16 = arith.constant 1.000000e+00 : f32
      %21 = vector.broadcast %cst_16 : f32 to vector<16x128xf32>
      %22 = arith.addf %21, %20 : vector<16x128xf32>
      %23 = arith.mulf %17, %22 : vector<16x128xf32>
      %c0_17 = arith.constant 0 : index
      %c0_18 = arith.constant 0 : index
      %24 = vector.load %arg6[%c0_17, %c0_18] : memref<16x128xf32, #tpu.memory_space<vmem>>, vector<16x128xf32>
      tpu.vector_store %arg6[%c0_17, %c0_18], %23 {strides = array<i32>} : memref<16x128xf32, #tpu.memory_space<vmem>>, vector<16x128xf32>,
    } else {
    }
    return
  }
  func.func @transform_0(%arg0: i32, %arg1: i32, %arg2: i32) -> (i32, i32) {
    %c0_i32 = arith.constant 0 : i32
    return %arg0, %arg2 : i32, i32
  }
  func.func @transform_1(%arg0: i32, %arg1: i32, %arg2: i32) -> (i32, i32) {
    %c0_i32 = arith.constant 0 : i32
    return %arg1, %arg2 : i32, i32
  }
  func.func @transform_2(%arg0: i32, %arg1: i32, %arg2: i32) -> (i32, i32) {
    %c0_i32 = arith.constant 0 : i32
    %c0_i32_0 = arith.constant 0 : i32
    return %c0_i32, %arg1 : i32, i32
  }
  func.func @transform_3(%arg0: i32, %arg1: i32, %arg2: i32) -> (i32, i32) {
    %c0_i32 = arith.constant 0 : i32
    return %arg0, %arg1 : i32, i32
  }
}

</mosaic_0001>

<llo_original>
// kernel: bert_intermediate.1
$region0: #{bert_intermediate.1}
  #allocation0 [shape = 'u32[]', space=smem, size = 0x4, offset = 0x4, fixed_abs, tag = 'smem constant byte address 0x4 - core index']
  #allocation1 [shape = 'u32[72,128]{1,0:T(1,128)}', space=vmem, size = 0x9000, scoped, tag = 'internal scratch']
  #allocation2 [shape = 'f32[16,128]{1,0:T(8,128)}', space=vmem, size = 0x2000, scoped, tag = 'scratch operand']
  %s0 = inlined_call_operand.vmem [shape: f32[16,32], index: 0, kind: input, shape index: {}]
  %s1 = inlined_call_operand.vmem [shape: f32[128,32], index: 1, kind: input, shape index: {}]
  %s2 = inlined_call_operand.vmem [shape: f32[1,128], index: 2, kind: input, shape index: {}]
  %s3 = inlined_call_operand.hbm [shape: f32[16,128], index: 3, kind: output, shape index: {}]
  %s4 = sld [smem:[#allocation0]]
  $region30: #{bert_intermediate.1} parent=0
    _
  %s6 = ssub.s32 1, %s4
  %s7 = scalar_select 0, %s6, %s4
  $region1: #{bert_intermediate.1} parent=0
    #allocation3 [shape = 'u8[8192]{0}', space=vmem, size = 0x2000, scoped, tag = 'output window, operand 0, single buffered']
    #allocation4 [shape = 's32[1]{0}', space=sflag, size = 0x4, scoped, tag = 'scoped memory for bert_intermediate.1']
    %8 = vsyncpa [#allocation4], 0
    // Predicated region
    $region2: #{bert_intermediate.1} parent=1 // pred_check
      _
    $region3: #{bert_intermediate.1} parent=1 // pred_check_branch
      %10 = sbr.rel (0) target = $region5
    $region4: #{bert_intermediate.1} parent=1 // pred_region
      _
    $region5: #{bert_intermediate.1} parent=1 // pred_fallthru
      _
    // Predicated region
    $region6: #{bert_intermediate.1} parent=1 // pred_check
      _
    $region7: #{bert_intermediate.1} parent=1 // pred_check_branch
      %12 = sbr.rel (0) target = $region9
    $region8: #{bert_intermediate.1} parent=1 // pred_region
      _
    $region9: #{bert_intermediate.1} parent=1 // pred_fallthru
      _
    // Predicated region
    $region10: #{bert_intermediate.1} parent=1 // pred_check
      _
    $region11: #{bert_intermediate.1} parent=1 // pred_check_branch
      %14 = sbr.rel (0) target = $region13
    $region12: #{bert_intermediate.1} parent=1 // pred_region
      _
    $region13: #{bert_intermediate.1} parent=1 // pred_fallthru
      _
    %p15 = scmp.eq.s32.totalorder 0, 0
    // Predicated region
    $region14: #{bert_intermediate.1} parent=1 // pred_check
      %p16 = pneg %p15
    $region15: #{bert_intermediate.1} parent=1 // pred_check_branch
      %18 = sbr.rel (%p16) target = $region17
    $region16: #{bert_intermediate.1} parent=1 // pred_region
      %19 = vst [vmem:[#allocation2] sm:$0xff] 0.0
      %20 = vst [vmem:[#allocation2 + $0x8] sm:$0xff] 0.0
    $region17: #{bert_intermediate.1} parent=1 // pred_fallthru
      _
    %v21 = vld [vmem:[#allocation2] sm:$0xff]
    %v22 = vld [vmem:[#allocation2 + $0x8] sm:$0xff]
    %v23 = vld [vmem:[%s0] sm:$0xff]
    %v24 = vld [vmem:[%s0 + $0x8] sm:$0xff]
    %v25 = vld [vmem:[%s1] sm:$0xff]
    %v26 = vld [vmem:[%s1 + $0x8] sm:$0xff]
    %v27 = vld [vmem:[%s1 + $0x10] sm:$0xff]
    %v28 = vld [vmem:[%s1 + $0x18] sm:$0xff]
    %v29 = vld [vmem:[%s1 + $0x20] sm:$0xff]
    %v30 = vld [vmem:[%s1 + $0x28] sm:$0xff]
    %v31 = vld [vmem:[%s1 + $0x30] sm:$0xff]
    %v32 = vld [vmem:[%s1 + $0x38] sm:$0xff]
    %v33 = vld [vmem:[%s1 + $0x40] sm:$0xff]
    %v34 = vld [vmem:[%s1 + $0x48] sm:$0xff]
    %v35 = vld [vmem:[%s1 + $0x50] sm:$0xff]
    %v36 = vld [vmem:[%s1 + $0x58] sm:$0xff]
    %v37 = vld [vmem:[%s1 + $0x60] sm:$0xff]
    %v38 = vld [vmem:[%s1 + $0x68] sm:$0xff]
    %v39 = vld [vmem:[%s1 + $0x70] sm:$0xff]
    %v40 = vld [vmem:[%s1 + $0x78] sm:$0xff]
    %vm41 = vcmask 261120
    %v43 = vsel %vm41, %v23, 0
    %v46 = vsel %vm41, %v24, 0
    %v49 = vsel %vm41, %v25, 0
    %v52 = vsel %vm41, %v26, 0
    %v55 = vsel %vm41, %v27, 0
    %v58 = vsel %vm41, %v28, 0
    %v61 = vsel %vm41, %v29, 0
    %v64 = vsel %vm41, %v30, 0
    %v67 = vsel %vm41, %v31, 0
    %v70 = vsel %vm41, %v32, 0
    %v73 = vsel %vm41, %v33, 0
    %v76 = vsel %vm41, %v34, 0
    %v79 = vsel %vm41, %v35, 0
    %v82 = vsel %vm41, %v36, 0
    %v85 = vsel %vm41, %v37, 0
    %v88 = vsel %vm41, %v38, 0
    %v91 = vsel %vm41, %v39, 0
    %v94 = vsel %vm41, %v40, 0
    %v96 = vand.u32 %v94, 4294901760
    %97 = vmatpush.xpose.msra.mxu0 %v96
    %v98 = vand.u32 %v91, 4294901760
    %99 = vmatpush.xpose.msra.mxu0 %v98
    %v100 = vand.u32 %v88, 4294901760
    %101 = vmatpush.xpose.msra.mxu0 %v100
    %v102 = vand.u32 %v85, 4294901760
    %103 = vmatpush.xpose.msra.mxu0 %v102
    %v104 = vand.u32 %v82, 4294901760
    %105 = vmatpush.xpose.msra.mxu0 %v104
    %v106 = vand.u32 %v79, 4294901760
    %107 = vmatpush.xpose.msra.mxu0 %v106
    %v108 = vand.u32 %v76, 4294901760
    %109 = vmatpush.xpose.msra.mxu0 %v108
    %v110 = vand.u32 %v73, 4294901760
    %111 = vmatpush.xpose.msra.mxu0 %v110
    %v112 = vand.u32 %v70, 4294901760
    %113 = vmatpush.xpose.msra.mxu0 %v112
    %v114 = vand.u32 %v67, 4294901760
    %115 = vmatpush.xpose.msra.mxu0 %v114
    %v116 = vand.u32 %v64, 4294901760
    %117 = vmatpush.xpose.msra.mxu0 %v116
    %v118 = vand.u32 %v61, 4294901760
    %119 = vmatpush.xpose.msra.mxu0 %v118
    %v120 = vand.u32 %v58, 4294901760
    %121 = vmatpush.xpose.msra.mxu0 %v120
    %v122 = vand.u32 %v55, 4294901760
    %123 = vmatpush.xpose.msra.mxu0 %v122
    %v124 = vand.u32 %v52, 4294901760
    %125 = vmatpush.xpose.msra.mxu0 %v124
    %v126 = vand.u32 %v49, 4294901760
    %127 = vmatpush.xpose.msra.mxu0 %v126
    %v128 = vand.u32 %v43, 4294901760
    %v129 = vsub.f32 %v43, %v128
    %v130 = vand.u32 %v129, 4294901760
    %v131 = vsub.f32 %v129, %v130
    %v132 = vand.u32 %v131, 4294901760
    %133 = vmatmul.f32.gmra.mxu0 %v132
    %v134 = vpop.f32.mrf.mxu0
    %v135 = vadd.f32 0.0, %v134
    %v136 = vand.u32 %v46, 4294901760
    %v137 = vsub.f32 %v46, %v136
    %v138 = vand.u32 %v137, 4294901760
    %v139 = vsub.f32 %v137, %v138
    %v140 = vand.u32 %v139, 4294901760
    %141 = vmatmul.f32.gmra.mxu0 %v140
    %v142 = vpop.f32.mrf.mxu0
    %v143 = vadd.f32 0.0, %v142
    %144 = vdwg.mxu0
    %v145 = vand.u32 %v94, 4294901760
    %v146 = vsub.f32 %v94, %v145
    %v147 = vand.u32 %v146, 4294901760
    %v148 = vsub.f32 %v146, %v147
    %v149 = vand.u32 %v148, 4294901760
    %150 = vmatpush.xpose.msra.mxu0 %v149
    %v151 = vand.u32 %v91, 4294901760
    %v152 = vsub.f32 %v91, %v151
    %v153 = vand.u32 %v152, 4294901760
    %v154 = vsub.f32 %v152, %v153
    %v155 = vand.u32 %v154, 4294901760
    %156 = vmatpush.xpose.msra.mxu0 %v155
    %v157 = vand.u32 %v88, 4294901760
    %v158 = vsub.f32 %v88, %v157
    %v159 = vand.u32 %v158, 4294901760
    %v160 = vsub.f32 %v158, %v159
    %v161 = vand.u32 %v160, 4294901760
    %162 = vmatpush.xpose.msra.mxu0 %v161
    %v163 = vand.u32 %v85, 4294901760
    %v164 = vsub.f32 %v85, %v163
    %v165 = vand.u32 %v164, 4294901760
    %v166 = vsub.f32 %v164, %v165
    %v167 = vand.u32 %v166, 4294901760
    %168 = vmatpush.xpose.msra.mxu0 %v167
    %v169 = vand.u32 %v82, 4294901760
    %v170 = vsub.f32 %v82, %v169
    %v171 = vand.u32 %v170, 4294901760
    %v172 = vsub.f32 %v170, %v171
    %v173 = vand.u32 %v172, 4294901760
    %174 = vmatpush.xpose.msra.mxu0 %v173
    %v175 = vand.u32 %v79, 4294901760
    %v176 = vsub.f32 %v79, %v175
    %v177 = vand.u32 %v176, 4294901760
    %v178 = vsub.f32 %v176, %v177
    %v179 = vand.u32 %v178, 4294901760
    %180 = vmatpush.xpose.msra.mxu0 %v179
    %v181 = vand.u32 %v76, 4294901760
    %v182 = vsub.f32 %v76, %v181
    %v183 = vand.u32 %v182, 4294901760
    %v184 = vsub.f32 %v182, %v183
    %v185 = vand.u32 %v184, 4294901760
    %186 = vmatpush.xpose.msra.mxu0 %v185
    %v187 = vand.u32 %v73, 4294901760
    %v188 = vsub.f32 %v73, %v187
    %v189 = vand.u32 %v188, 4294901760
    %v190 = vsub.f32 %v188, %v189
    %v191 = vand.u32 %v190, 4294901760
    %192 = vmatpush.xpose.msra.mxu0 %v191
    %v193 = vand.u32 %v70, 4294901760
    %v194 = vsub.f32 %v70, %v193
    %v195 = vand.u32 %v194, 4294901760
    %v196 = vsub.f32 %v194, %v195
    %v197 = vand.u32 %v196, 4294901760
    %198 = vmatpush.xpose.msra.mxu0 %v197
    %v199 = vand.u32 %v67, 4294901760
    %v200 = vsub.f32 %v67, %v199
    %v201 = vand.u32 %v200, 4294901760
    %v202 = vsub.f32 %v200, %v201
    %v203 = vand.u32 %v202, 4294901760
    %204 = vmatpush.xpose.msra.mxu0 %v203
    %v205 = vand.u32 %v64, 4294901760
    %v206 = vsub.f32 %v64, %v205
    %v207 = vand.u32 %v206, 4294901760
    %v208 = vsub.f32 %v206, %v207
    %v209 = vand.u32 %v208, 4294901760
    %210 = vmatpush.xpose.msra.mxu0 %v209
    %v211 = vand.u32 %v61, 4294901760
    %v212 = vsub.f32 %v61, %v211
    %v213 = vand.u32 %v212, 4294901760
    %v214 = vsub.f32 %v212, %v213
    %v215 = vand.u32 %v214, 4294901760
    %216 = vmatpush.xpose.msra.mxu0 %v215
    %v217 = vand.u32 %v58, 4294901760
    %v218 = vsub.f32 %v58, %v217
    %v219 = vand.u32 %v218, 4294901760
    %v220 = vsub.f32 %v218, %v219
    %v221 = vand.u32 %v220, 4294901760
    %222 = vmatpush.xpose.msra.mxu0 %v221
    %v223 = vand.u32 %v55, 4294901760
    %v224 = vsub.f32 %v55, %v223
    %v225 = vand.u32 %v224, 4294901760
    %v226 = vsub.f32 %v224, %v225
    %v227 = vand.u32 %v226, 4294901760
    %228 = vmatpush.xpose.msra.mxu0 %v227
    %v229 = vand.u32 %v52, 4294901760
    %v230 = vsub.f32 %v52, %v229
    %v231 = vand.u32 %v230, 4294901760
    %v232 = vsub.f32 %v230, %v231
    %v233 = vand.u32 %v232, 4294901760
    %234 = vmatpush.xpose.msra.mxu0 %v233
    %v235 = vand.u32 %v49, 4294901760
    %v236 = vsub.f32 %v49, %v235
    %v237 = vand.u32 %v236, 4294901760
    %v238 = vsub.f32 %v236, %v237
    %v239 = vand.u32 %v238, 4294901760
    %240 = vmatpush.xpose.msra.mxu0 %v239
    %v241 = vand.u32 %v43, 4294901760
    %242 = vmatmul.f32.gmra.mxu0 %v241
    %v243 = vpop.f32.mrf.mxu0
    %v244 = vadd.f32 %v135, %v243
    %v245 = vand.u32 %v46, 4294901760
    %246 = vmatmul.f32.gmra.mxu0 %v245
    %v247 = vpop.f32.mrf.mxu0
    %v248 = vadd.f32 %v143, %v247
    %249 = vdwg.mxu0
    %v250 = vand.u32 %v94, 4294901760
    %v251 = vsub.f32 %v94, %v250
    %252 = vmatpush.xpose.msra.mxu0 %v251
    %v253 = vand.u32 %v91, 4294901760
    %v254 = vsub.f32 %v91, %v253
    %255 = vmatpush.xpose.msra.mxu0 %v254
    %v256 = vand.u32 %v88, 4294901760
    %v257 = vsub.f32 %v88, %v256
    %258 = vmatpush.xpose.msra.mxu0 %v257
    %v259 = vand.u32 %v85, 4294901760
    %v260 = vsub.f32 %v85, %v259
    %261 = vmatpush.xpose.msra.mxu0 %v260
    %v262 = vand.u32 %v82, 4294901760
    %v263 = vsub.f32 %v82, %v262
    %264 = vmatpush.xpose.msra.mxu0 %v263
    %v265 = vand.u32 %v79, 4294901760
    %v266 = vsub.f32 %v79, %v265
    %267 = vmatpush.xpose.msra.mxu0 %v266
    %v268 = vand.u32 %v76, 4294901760
    %v269 = vsub.f32 %v76, %v268
    %270 = vmatpush.xpose.msra.mxu0 %v269
    %v271 = vand.u32 %v73, 4294901760
    %v272 = vsub.f32 %v73, %v271
    %273 = vmatpush.xpose.msra.mxu0 %v272
    %v274 = vand.u32 %v70, 4294901760
    %v275 = vsub.f32 %v70, %v274
    %276 = vmatpush.xpose.msra.mxu0 %v275
    %v277 = vand.u32 %v67, 4294901760
    %v278 = vsub.f32 %v67, %v277
    %279 = vmatpush.xpose.msra.mxu0 %v278
    %v280 = vand.u32 %v64, 4294901760
    %v281 = vsub.f32 %v64, %v280
    %282 = vmatpush.xpose.msra.mxu0 %v281
    %v283 = vand.u32 %v61, 4294901760
    %v284 = vsub.f32 %v61, %v283
    %285 = vmatpush.xpose.msra.mxu0 %v284
    %v286 = vand.u32 %v58, 4294901760
    %v287 = vsub.f32 %v58, %v286
    %288 = vmatpush.xpose.msra.mxu0 %v287
    %v289 = vand.u32 %v55, 4294901760
    %v290 = vsub.f32 %v55, %v289
    %291 = vmatpush.xpose.msra.mxu0 %v290
    %v292 = vand.u32 %v52, 4294901760
    %v293 = vsub.f32 %v52, %v292
    %294 = vmatpush.xpose.msra.mxu0 %v293
    %v295 = vand.u32 %v49, 4294901760
    %v296 = vsub.f32 %v49, %v295
    %297 = vmatpush.xpose.msra.mxu0 %v296
    %v298 = vand.u32 %v43, 4294901760
    %v299 = vsub.f32 %v43, %v298
    %300 = vmatmul.f32.gmra.mxu0 %v299
    %v301 = vpop.f32.mrf.mxu0
    %v302 = vadd.f32 %v244, %v301
    %v303 = vand.u32 %v46, 4294901760
    %v304 = vsub.f32 %v46, %v303
    %305 = vmatmul.f32.gmra.mxu0 %v304
    %v306 = vpop.f32.mrf.mxu0
    %v307 = vadd.f32 %v248, %v306
    %308 = vdwg.mxu0
    %v309 = vand.u32 %v94, 4294901760
    %310 = vmatpush.xpose.msra.mxu0 %v309
    %v311 = vand.u32 %v91, 4294901760
    %312 = vmatpush.xpose.msra.mxu0 %v311
    %v313 = vand.u32 %v88, 4294901760
    %314 = vmatpush.xpose.msra.mxu0 %v313
    %v315 = vand.u32 %v85, 4294901760
    %316 = vmatpush.xpose.msra.mxu0 %v315
    %v317 = vand.u32 %v82, 4294901760
    %318 = vmatpush.xpose.msra.mxu0 %v317
    %v319 = vand.u32 %v79, 4294901760
    %320 = vmatpush.xpose.msra.mxu0 %v319
    %v321 = vand.u32 %v76, 4294901760
    %322 = vmatpush.xpose.msra.mxu0 %v321
    %v323 = vand.u32 %v73, 4294901760
    %324 = vmatpush.xpose.msra.mxu0 %v323
    %v325 = vand.u32 %v70, 4294901760
    %326 = vmatpush.xpose.msra.mxu0 %v325
    %v327 = vand.u32 %v67, 4294901760
    %328 = vmatpush.xpose.msra.mxu0 %v327
    %v329 = vand.u32 %v64, 4294901760
    %330 = vmatpush.xpose.msra.mxu0 %v329
    %v331 = vand.u32 %v61, 4294901760
    %332 = vmatpush.xpose.msra.mxu0 %v331
    %v333 = vand.u32 %v58, 4294901760
    %334 = vmatpush.xpose.msra.mxu0 %v333
    %v335 = vand.u32 %v55, 4294901760
    %336 = vmatpush.xpose.msra.mxu0 %v335
    %v337 = vand.u32 %v52, 4294901760
    %338 = vmatpush.xpose.msra.mxu0 %v337
    %v339 = vand.u32 %v49, 4294901760
    %340 = vmatpush.xpose.msra.mxu0 %v339
    %v341 = vand.u32 %v43, 4294901760
    %v342 = vsub.f32 %v43, %v341
    %v343 = vand.u32 %v342, 4294901760
    %344 = vmatmul.f32.gmra.mxu0 %v343
    %v345 = vpop.f32.mrf.mxu0
    %v346 = vadd.f32 %v302, %v345
    %v347 = vand.u32 %v46, 4294901760
    %v348 = vsub.f32 %v46, %v347
    %v349 = vand.u32 %v348, 4294901760
    %350 = vmatmul.f32.gmra.mxu0 %v349
    %v351 = vpop.f32.mrf.mxu0
    %v352 = vadd.f32 %v307, %v351
    %353 = vdwg.mxu0
    %v354 = vand.u32 %v94, 4294901760
    %v355 = vsub.f32 %v94, %v354
    %v356 = vand.u32 %v355, 4294901760
    %357 = vmatpush.xpose.msra.mxu0 %v356
    %v358 = vand.u32 %v91, 4294901760
    %v359 = vsub.f32 %v91, %v358
    %v360 = vand.u32 %v359, 4294901760
    %361 = vmatpush.xpose.msra.mxu0 %v360
    %v362 = vand.u32 %v88, 4294901760
    %v363 = vsub.f32 %v88, %v362
    %v364 = vand.u32 %v363, 4294901760
    %365 = vmatpush.xpose.msra.mxu0 %v364
    %v366 = vand.u32 %v85, 4294901760
    %v367 = vsub.f32 %v85, %v366
    %v368 = vand.u32 %v367, 4294901760
    %369 = vmatpush.xpose.msra.mxu0 %v368
    %v370 = vand.u32 %v82, 4294901760
    %v371 = vsub.f32 %v82, %v370
    %v372 = vand.u32 %v371, 4294901760
    %373 = vmatpush.xpose.msra.mxu0 %v372
    %v374 = vand.u32 %v79, 4294901760
    %v375 = vsub.f32 %v79, %v374
    %v376 = vand.u32 %v375, 4294901760
    %377 = vmatpush.xpose.msra.mxu0 %v376
    %v378 = vand.u32 %v76, 4294901760
    %v379 = vsub.f32 %v76, %v378
    %v380 = vand.u32 %v379, 4294901760
    %381 = vmatpush.xpose.msra.mxu0 %v380
    %v382 = vand.u32 %v73, 4294901760
    %v383 = vsub.f32 %v73, %v382
    %v384 = vand.u32 %v383, 4294901760
    %385 = vmatpush.xpose.msra.mxu0 %v384
    %v386 = vand.u32 %v70, 4294901760
    %v387 = vsub.f32 %v70, %v386
    %v388 = vand.u32 %v387, 4294901760
    %389 = vmatpush.xpose.msra.mxu0 %v388
    %v390 = vand.u32 %v67, 4294901760
    %v391 = vsub.f32 %v67, %v390
    %v392 = vand.u32 %v391, 4294901760
    %393 = vmatpush.xpose.msra.mxu0 %v392
    %v394 = vand.u32 %v64, 4294901760
    %v395 = vsub.f32 %v64, %v394
    %v396 = vand.u32 %v395, 4294901760
    %397 = vmatpush.xpose.msra.mxu0 %v396
    %v398 = vand.u32 %v61, 4294901760
    %v399 = vsub.f32 %v61, %v398
    %v400 = vand.u32 %v399, 4294901760
    %401 = vmatpush.xpose.msra.mxu0 %v400
    %v402 = vand.u32 %v58, 4294901760
    %v403 = vsub.f32 %v58, %v402
    %v404 = vand.u32 %v403, 4294901760
    %405 = vmatpush.xpose.msra.mxu0 %v404
    %v406 = vand.u32 %v55, 4294901760
    %v407 = vsub.f32 %v55, %v406
    %v408 = vand.u32 %v407, 4294901760
    %409 = vmatpush.xpose.msra.mxu0 %v408
    %v410 = vand.u32 %v52, 4294901760
    %v411 = vsub.f32 %v52, %v410
    %v412 = vand.u32 %v411, 4294901760
    %413 = vmatpush.xpose.msra.mxu0 %v412
    %v414 = vand.u32 %v49, 4294901760
    %v415 = vsub.f32 %v49, %v414
    %v416 = vand.u32 %v415, 4294901760
    %417 = vmatpush.xpose.msra.mxu0 %v416
    %v418 = vand.u32 %v43, 4294901760
    %419 = vmatmul.f32.gmra.mxu0 %v418
    %v420 = vpop.f32.mrf.mxu0
    %v421 = vadd.f32 %v346, %v420
    %v422 = vand.u32 %v46, 4294901760
    %423 = vmatmul.f32.gmra.mxu0 %v422
    %v424 = vpop.f32.mrf.mxu0
    %v425 = vadd.f32 %v352, %v424
    %426 = vdwg.mxu0
    %v427 = vand.u32 %v94, 4294901760
    %428 = vmatpush.xpose.msra.mxu0 %v427
    %v429 = vand.u32 %v91, 4294901760
    %430 = vmatpush.xpose.msra.mxu0 %v429
    %v431 = vand.u32 %v88, 4294901760
    %432 = vmatpush.xpose.msra.mxu0 %v431
    %v433 = vand.u32 %v85, 4294901760
    %434 = vmatpush.xpose.msra.mxu0 %v433
    %v435 = vand.u32 %v82, 4294901760
    %436 = vmatpush.xpose.msra.mxu0 %v435
    %v437 = vand.u32 %v79, 4294901760
    %438 = vmatpush.xpose.msra.mxu0 %v437
    %v439 = vand.u32 %v76, 4294901760
    %440 = vmatpush.xpose.msra.mxu0 %v439
    %v441 = vand.u32 %v73, 4294901760
    %442 = vmatpush.xpose.msra.mxu0 %v441
    %v443 = vand.u32 %v70, 4294901760
    %444 = vmatpush.xpose.msra.mxu0 %v443
    %v445 = vand.u32 %v67, 4294901760
    %446 = vmatpush.xpose.msra.mxu0 %v445
    %v447 = vand.u32 %v64, 4294901760
    %448 = vmatpush.xpose.msra.mxu0 %v447
    %v449 = vand.u32 %v61, 4294901760
    %450 = vmatpush.xpose.msra.mxu0 %v449
    %v451 = vand.u32 %v58, 4294901760
    %452 = vmatpush.xpose.msra.mxu0 %v451
    %v453 = vand.u32 %v55, 4294901760
    %454 = vmatpush.xpose.msra.mxu0 %v453
    %v455 = vand.u32 %v52, 4294901760
    %456 = vmatpush.xpose.msra.mxu0 %v455
    %v457 = vand.u32 %v49, 4294901760
    %458 = vmatpush.xpose.msra.mxu0 %v457
    %v459 = vand.u32 %v43, 4294901760
    %460 = vmatmul.f32.gmra.mxu0 %v459
    %v461 = vpop.f32.mrf.mxu0
    %v462 = vadd.f32 %v421, %v461
    %v463 = vand.u32 %v46, 4294901760
    %464 = vmatmul.f32.gmra.mxu0 %v463
    %v465 = vpop.f32.mrf.mxu0
    %v466 = vadd.f32 %v425, %v465
    %467 = vdwg.mxu0
    %v468 = vadd.f32 %v21, %v462
    %v469 = vadd.f32 %v22, %v466
    %470 = vst [vmem:[#allocation2] sm:$0xff] %v468
    %471 = vst [vmem:[#allocation2 + $0x8] sm:$0xff] %v469
    // Predicated region
    $region18: #{bert_intermediate.1} parent=1 // pred_check
      %p472 = pneg %p15
    $region19: #{bert_intermediate.1} parent=1 // pred_check_branch
      %474 = sbr.rel (%p472) target = $region21
    $region20: #{bert_intermediate.1} parent=1 // pred_region
      %v475 = vld [vmem:[#allocation2] sm:$0xff]
      %v476 = vld [vmem:[#allocation2 + $0x8] sm:$0xff]
      %v477 = vld [vmem:[%s2] sm:$0x1]
      %v479 = vperm.slane %v477, 0
      %v481 = vadd.f32 %v475, %v479
      %v482 = vadd.f32 %v476, %v479
      %v483 = vmul.f32 %v481, 0.5
      %v484 = vmul.f32 %v482, 0.5
      %v485 = vmul.f32 %v481, 0.70710677
      %v486 = vmul.f32 %v482, 0.70710677
      %v487 = vmul.f32 %v485, %v485
      %v488 = vmin.f32 16.0, %v487
      %v489 = vmul.f32 %v488, 2.1237322e-06
      %v490 = vadd.f32 %v489, 0.00028619796
      %v491 = vmul.f32 %v488, %v490
      %v492 = vadd.f32 %v491, 0.0036580483
      %v493 = vmul.f32 %v488, %v492
      %v494 = vadd.f32 %v493, 0.05243302
      %v495 = vmul.f32 %v488, %v494
      %v496 = vadd.f32 %v495, 0.18741608
      %v497 = vmul.f32 %v488, %v496
      %v498 = vadd.f32 %v497, 1.1283791
      %v499 = vmul.f32 %v485, %v498
      %v500 = vmul.f32 %v488, 3.8918573e-05
      %v501 = vadd.f32 %v500, 0.001143296
      %v502 = vmul.f32 %v488, %v501
      %v503 = vadd.f32 %v502, 0.014752088
      %v504 = vmul.f32 %v488, %v503
      %v505 = vadd.f32 %v504, 0.112945676
      %v506 = vmul.f32 %v488, %v505
      %v507 = vadd.f32 %v506, 0.4994258
      %v508 = vmul.f32 %v488, %v507
      %v509 = vadd.f32 %v508, 1.0
      %v510 = vrcp.pop %v509
      %v511 = vmul.f32 %v509, %v510
      %v512 = vsub.f32 1.0, %v511
      %v513 = vmul.f32 %v510, %v512
      %v514 = vadd.f32 %v510, %v513
      %vm515 = vweird.f32 %v509
      %vm516 = vweird.f32 %v510
      %vm517 = vmor %vm515, %vm516
      %v518 = vsel %vm517, %v510, %v514
      %v519 = vand.u32 2147483647, %v509
      %vm520 = vcmp.eq.f32.partialorder %v519, 8.507059e+37
      %v521 = vand.u32 %v509, 2147483648
      %v522 = vor.u32 1.1754944e-38, %v521
      %v523 = vsel %vm520, %v522, %v518
      %v524 = vmul.f32 %v499, %v523
      %v525 = vmin.f32 %v524, 1.0
      %v526 = vmax.f32 %v525, -1.0
      %v527 = vmul.f32 %v486, %v486
      %v528 = vmin.f32 16.0, %v527
      %v529 = vmul.f32 %v528, 2.1237322e-06
      %v530 = vadd.f32 %v529, 0.00028619796
      %v531 = vmul.f32 %v528, %v530
      %v532 = vadd.f32 %v531, 0.0036580483
      %v533 = vmul.f32 %v528, %v532
      %v534 = vadd.f32 %v533, 0.05243302
      %v535 = vmul.f32 %v528, %v534
      %v536 = vadd.f32 %v535, 0.18741608
      %v537 = vmul.f32 %v528, %v536
      %v538 = vadd.f32 %v537, 1.1283791
      %v539 = vmul.f32 %v486, %v538
      %v540 = vmul.f32 %v528, 3.8918573e-05
      %v541 = vadd.f32 %v540, 0.001143296
      %v542 = vmul.f32 %v528, %v541
      %v543 = vadd.f32 %v542, 0.014752088
      %v544 = vmul.f32 %v528, %v543
      %v545 = vadd.f32 %v544, 0.112945676
      %v546 = vmul.f32 %v528, %v545
      %v547 = vadd.f32 %v546, 0.4994258
      %v548 = vmul.f32 %v528, %v547
      %v549 = vadd.f32 %v548, 1.0
      %v550 = vrcp.pop %v549
      %v551 = vmul.f32 %v549, %v550
      %v552 = vsub.f32 1.0, %v551
      %v553 = vmul.f32 %v550, %v552
      %v554 = vadd.f32 %v550, %v553
      %vm555 = vweird.f32 %v549
      %vm556 = vweird.f32 %v550
      %vm557 = vmor %vm555, %vm556
      %v558 = vsel %vm557, %v550, %v554
      %v559 = vand.u32 2147483647, %v549
      %vm560 = vcmp.eq.f32.partialorder %v559, 8.507059e+37
      %v561 = vand.u32 %v549, 2147483648
      %v562 = vor.u32 1.1754944e-38, %v561
      %v563 = vsel %vm560, %v562, %v558
      %v564 = vmul.f32 %v539, %v563
      %v565 = vmin.f32 %v564, 1.0
      %v566 = vmax.f32 %v565, -1.0
      %v567 = vadd.f32 %v526, 1.0
      %v568 = vadd.f32 %v566, 1.0
      %v569 = vmul.f32 %v483, %v567
      %v570 = vmul.f32 %v484, %v568
      %571 = vst [vmem:[#allocation3] sm:$0xff] %v569
      %572 = vst [vmem:[#allocation3 + $0x8] sm:$0xff] %v570
    $region21: #{bert_intermediate.1} parent=1 // pred_fallthru
      _
    // Predicated region
    $region22: #{bert_intermediate.1} parent=1 // pred_check
      _
    $region23: #{bert_intermediate.1} parent=1 // pred_check_branch
      %574 = sbr.rel (0) target = $region25
    $region24: #{bert_intermediate.1} parent=1 // pred_region
      %576 = vsyncadd [#allocation4], 0
      %s577 = sshll.u32 [#allocation3], 4
      %s578 = int_to_ptr.vmem [resolvable:$true] %s577
      %s579 = sshll.u32 %s3, 4
      %s580 = int_to_ptr.hbm [resolvable:$true] %s579
      %585 = dma.vmem_to_hbm [thread:$0]  %s578, 256, %s580, [#allocation4], 128, 128, 8
    $region25: #{bert_intermediate.1} parent=1 // pred_fallthru
      _
    // Predicated region
    $region26: #{bert_intermediate.1} parent=1 // pred_check
      _
    $region27: #{bert_intermediate.1} parent=1 // pred_check_branch
      %587 = sbr.rel (0) target = $region29
    $region28: #{bert_intermediate.1} parent=1 // pred_region
      %589 = dma.done [#allocation4], 256
    $region29: #{bert_intermediate.1} parent=1 // pred_fallthru
      _
    %590 = vsyncpa [#allocation4], 1

</llo_original>
